<compile_context>
chip_gen: v7x
topology: tpu7x:2x2x1
jax: 0.10.0
libtpu: 0.0.40
codegen_flags: <defaults>
</compile_context>

<pallas_src>
import functools

import jax
import jax.numpy as jnp
from jax.experimental import pallas as pl
from jax.experimental.pallas import tpu as pltpu

EPS = 1e-5
K = 5  # Conv1d kernel_size


def resblock_kernel(x_ref, w1_ref, bn1_ref, w2_ref, bn2_ref, o_ref):
    # x_ref:   (N, Cin_p, L) f32   (channels zero-padded to the sublane tile)
    # w1_ref:  (C1, K*Cin_p) mm-dtype      w2_ref: (C2, K*C1) mm-dtype
    # bn1_ref: (2, C1, 1) f32 [gamma; beta]   bn2_ref: (2, C2, 1) f32
    # o_ref:   (N, C2, L2) f32  -- NCL, L on lanes (lane-dense store)
    N, cin_p, L = x_ref.shape
    C1 = w1_ref.shape[0]
    C2 = w2_ref.shape[0]
    L1 = L - (K - 1)
    L2 = L1 - (K - 1)
    mmdt = w1_ref.dtype

    # bf16-before-im2col: cast once so every tap slice / concat moves half bytes.
    x = x_ref[...].astype(mmdt)                               # (N, Cin_p, L)

    # ---- conv1: im2col with the batch folded into lanes ---------------------
    # cols1[k*Cin_p + c, n*L1 + l] = x[n, c, l + k]; windows never cross batches.
    # TODO(synk): if a bundle dump shows the shifted lane slices lowering to
    # materialized copies (not XLU rotates), switch to
    # pltpu.roll(x[n], shift=L - k, axis=-1)[:, :L1] to use the idle XLU slot.
    cols1 = jnp.concatenate(
        [jnp.concatenate([x[n, :, k:k + L1] for k in range(K)], axis=0)
         for n in range(N)], axis=1)                          # (K*Cin_p, N*L1)
    y1 = jnp.dot(w1_ref[...], cols1,
                 preferred_element_type=jnp.float32)          # (C1, N*L1)

    # ---- BatchNorm1d(C1): single-pass batch stats, folded affine, ReLU ------
    inv1 = 1.0 / float(N * L1)
    m1 = jnp.sum(y1, axis=1, keepdims=True) * inv1            # (C1, 1)
    v1 = jnp.sum(y1 * y1, axis=1, keepdims=True) * inv1 - m1 * m1
    sc1 = bn1_ref[0] * jax.lax.rsqrt(v1 + EPS)                # gamma * inv_std
    sh1 = bn1_ref[1] - m1 * sc1                               # beta - mean*scale
    h1 = jnp.maximum(y1 * sc1 + sh1, 0.0)                     # (C1, N*L1) f32
    h1m = h1.astype(mmdt)                                     # cast before im2col

    # ---- conv2: im2col over hidden channels (contraction K*C1 = 160) --------
    cols2 = jnp.concatenate(
        [jnp.concatenate(
            [h1m[:, n * L1 + k: n * L1 + k + L2] for k in range(K)], axis=0)
         for n in range(N)], axis=1)                          # (K*C1, N*L2)
    y2 = jnp.dot(w2_ref[...], cols2,
                 preferred_element_type=jnp.float32)          # (C2, N*L2)

    # ---- BatchNorm1d(C2) + ReLU ---------------------------------------------
    inv2 = 1.0 / float(N * L2)
    m2 = jnp.sum(y2, axis=1, keepdims=True) * inv2
    v2 = jnp.sum(y2 * y2, axis=1, keepdims=True) * inv2 - m2 * m2
    sc2 = bn2_ref[0] * jax.lax.rsqrt(v2 + EPS)
    sh2 = bn2_ref[1] - m2 * sc2
    out = jnp.maximum(y2 * sc2 + sh2, 0.0).astype(o_ref.dtype)  # (C2, N*L2)

    # Per-batch stores; with L2 a multiple of 128 each store is lane-dense.
    for n in range(N):
        o_ref[n] = out[:, n * L2:(n + 1) * L2]


def pack_params(params, *, matmul_dtype=jnp.float32):
    """One-time repack of PyTorch-layout ResBlock params for the kernel."""
    c1, c_in, _ = params["w1"].shape
    c2 = params["w2"].shape[0]
    # Pad C_in to the sublane tile of the MXU-operand dtype (16 for bf16, 8 for
    # fp32) so the in-kernel im2col concat is tile-aligned; padded weights are
    # zero so results are unchanged.
    sub = 16 if matmul_dtype == jnp.bfloat16 else 8
    cin_p = c_in + ((-c_in) % sub)
    w1m = jnp.transpose(params["w1"], (0, 2, 1))              # (C1, K, Cin)
    w1m = jnp.pad(w1m, ((0, 0), (0, 0), (0, cin_p - c_in)))
    w1m = w1m.reshape(c1, K * cin_p).astype(matmul_dtype)
    w2m = jnp.transpose(params["w2"], (0, 2, 1)).reshape(c2, K * c1)
    w2m = w2m.astype(matmul_dtype)
    # Conv biases dropped: train-mode BatchNorm's mean subtraction cancels them
    # exactly.  (Does NOT hold for eval-mode running stats -- gate if reused.)
    bn1 = jnp.stack([params["g1"], params["be1"]]).reshape(2, c1, 1)
    bn2 = jnp.stack([params["g2"], params["be2"]]).reshape(2, c2, 1)
    return dict(w1m=w1m, bn1=bn1, w2m=w2m, bn2=bn2)


@jax.jit
def resblock_forward(x_ncl, packed):
    """x_ncl: (N, C_in, L) float32 (PyTorch NCL) -> (N, 48, L-8) float32."""
    N, c_in, L = x_ncl.shape
    w1m, w2m = packed["w1m"], packed["w2m"]
    bn1, bn2 = packed["bn1"], packed["bn2"]
    cin_p = w1m.shape[1] // K
    c1, c2 = w1m.shape[0], w2m.shape[0]
    L1 = L - (K - 1)
    L2 = L1 - (K - 1)

    x_p = (jnp.pad(x_ncl, ((0, 0), (0, cin_p - c_in), (0, 0)))
           if cin_p != c_in else x_ncl)

    flops = 2 * c1 * w1m.shape[1] * N * L1 + 2 * c2 * w2m.shape[1] * N * L2
    bytes_accessed = (x_p.size * 4
                      + w1m.size * w1m.dtype.itemsize
                      + w2m.size * w2m.dtype.itemsize
                      + (bn1.size + bn2.size) * 4
                      + N * c2 * L2 * 4)

    vmem = functools.partial(pl.BlockSpec, memory_space=pltpu.MemorySpace.VMEM)
    # TODO(synk): for large N*L, add a grid over L tiles (two-pass BN: stats
    # accumulated in persistent VMEM scratch, then scale/shift+ReLU) with the
    # tile axis marked "parallel" so v7x's second TensorCore is used, and keep
    # each output tile a multiple of 128 lanes; single-shot wins at these shapes.
    return pl.pallas_call(
        resblock_kernel,
        out_shape=jax.ShapeDtypeStruct((N, c2, L2), jnp.float32),
        in_specs=[vmem()] * 5,
        out_specs=vmem(),
        compiler_params=pltpu.CompilerParams(vmem_limit_bytes=32 * 1024 * 1024),
        cost_estimate=pl.CostEstimate(flops=flops,
                                      transcendentals=c1 + c2,
                                      bytes_accessed=bytes_accessed),
    )(x_p, w1m, bn1, w2m, bn2)


# ------------------------- pure-JAX reference --------------------------------
def ref_forward(x_ncl, params):
    def conv_bn_relu(x, w, b, g, be):
        y = jax.lax.conv_general_dilated(
            x, w, (1,), "VALID", dimension_numbers=("NCH", "OIH", "NCH"),
            precision=jax.lax.Precision.HIGHEST)
        y = y + b.reshape(1, -1, 1)
        m = y.mean(axis=(0, 2), keepdims=True)
        v = ((y - m) ** 2).mean(axis=(0, 2), keepdims=True)
        h = (y - m) * jax.lax.rsqrt(v + EPS) * g.reshape(1, -1, 1) + be.reshape(1, -1, 1)
        return jnp.maximum(h, 0.0)

    h = conv_bn_relu(x_ncl, params["w1"], params["b1"], params["g1"], params["be1"])
    h = conv_bn_relu(h, params["w2"], params["b2"], params["g2"], params["be2"])
    return h


def make_params(key, inp_feats):
    ks = jax.random.split(key, 8)
    # PyTorch Conv1d weight layout: (C_out, C_in, K); biases/affine: (C,).
    w1 = jax.random.normal(ks[0], (32, inp_feats, K), jnp.float32) * 0.2
    b1 = jax.random.normal(ks[1], (32,), jnp.float32) * 0.1
    g1 = 1.0 + 0.1 * jax.random.normal(ks[2], (32,), jnp.float32)
    be1 = 0.1 * jax.random.normal(ks[3], (32,), jnp.float32)
    w2 = jax.random.normal(ks[4], (48, 32, K), jnp.float32) * 0.1
    b2 = jax.random.normal(ks[5], (48,), jnp.float32) * 0.1
    g2 = 1.0 + 0.1 * jax.random.normal(ks[6], (48,), jnp.float32)
    be2 = 0.1 * jax.random.normal(ks[7], (48,), jnp.float32)
    return dict(w1=w1, b1=b1, g1=g1, be1=be1, w2=w2, b2=b2, g2=g2, be2=be2)


if __name__ == "__main__":
    key = jax.random.PRNGKey(0)
    k_x, k_p = jax.random.split(key)

    # Small shapes: batch=2, inp_feats=4, length=136 so L2 = L-8 = 128 and
    # N*L2 = 256 keep every store / post-conv2 slab fully lane-dense.
    inp_feats, N, L = 4, 2, 136
    x = jax.random.normal(k_x, (N, inp_feats, L), jnp.float32)   # PyTorch NCL
    params = make_params(k_p, inp_feats)

    ref = jax.block_until_ready(ref_forward(x, params))

    # fp32 MXU-operand path — strict check against the reference.
    packed_f32 = pack_params(params, matmul_dtype=jnp.float32)
    out = jax.block_until_ready(resblock_forward(x, packed_f32))
    assert out.shape == (N, 48, L - 8), out.shape
    assert jnp.allclose(out, ref, rtol=1e-4, atol=1e-4), \
        float(jnp.max(jnp.abs(out - ref)))

    # bf16 MXU-operand path (bf16-native MXU on v5e/v6e/v7x); fp32 accumulation
    # and fp32 BN.  Tolerance reflects bf16 operand rounding only.
    packed_bf16 = pack_params(params, matmul_dtype=jnp.bfloat16)
    out_bf16 = jax.block_until_ready(resblock_forward(x, packed_bf16))
    assert jnp.allclose(out_bf16, ref, rtol=3e-2, atol=3e-2), \
        float(jnp.max(jnp.abs(out_bf16 - ref)))

    print("KERNEL_OK")
</pallas_src>

<mosaic_0001>
module attributes {stable_mosaic.version = 11 : i64} {
  func.func @resblock_kernel(%arg0: memref<2x8x136xf32, #tpu.memory_space<vmem>>, %arg1: memref<32x40xf32, #tpu.memory_space<vmem>>, %arg2: memref<2x32x1xf32, #tpu.memory_space<vmem>>, %arg3: memref<48x160xf32, #tpu.memory_space<vmem>>, %arg4: memref<2x48x1xf32, #tpu.memory_space<vmem>>, %arg5: memref<2x48x128xf32, #tpu.memory_space<vmem>>) attributes {dimension_semantics = [], scalar_prefetch = 0 : i64, scratch_operands = 0 : i64, tpu.core_type = #tpu.core_type<tc>} {
    %c0 = arith.constant 0 : index
    %c0_0 = arith.constant 0 : index
    %c0_1 = arith.constant 0 : index
    %0 = vector.load %arg0[%c0, %c0_0, %c0_1] : memref<2x8x136xf32, #tpu.memory_space<vmem>>, vector<2x8x136xf32>
    %1 = vector.extract_strided_slice %0 {offsets = [0, 0, 0], sizes = [1, 8, 132], strides = [1, 1, 1]} : vector<2x8x136xf32> to vector<1x8x132xf32>
    %2 = vector.shape_cast %1 : vector<1x8x132xf32> to vector<8x132xf32>
    %3 = vector.extract_strided_slice %0 {offsets = [0, 0, 1], sizes = [1, 8, 132], strides = [1, 1, 1]} : vector<2x8x136xf32> to vector<1x8x132xf32>
    %4 = vector.shape_cast %3 : vector<1x8x132xf32> to vector<8x132xf32>
    %5 = vector.extract_strided_slice %0 {offsets = [0, 0, 2], sizes = [1, 8, 132], strides = [1, 1, 1]} : vector<2x8x136xf32> to vector<1x8x132xf32>
    %6 = vector.shape_cast %5 : vector<1x8x132xf32> to vector<8x132xf32>
    %7 = vector.extract_strided_slice %0 {offsets = [0, 0, 3], sizes = [1, 8, 132], strides = [1, 1, 1]} : vector<2x8x136xf32> to vector<1x8x132xf32>
    %8 = vector.shape_cast %7 : vector<1x8x132xf32> to vector<8x132xf32>
    %9 = vector.extract_strided_slice %0 {offsets = [0, 0, 4], sizes = [1, 8, 132], strides = [1, 1, 1]} : vector<2x8x136xf32> to vector<1x8x132xf32>
    %10 = vector.shape_cast %9 : vector<1x8x132xf32> to vector<8x132xf32>
    %11 = tpu.concatenate %2, %4, %6, %8, %10 in 0 : vector<8x132xf32>, vector<8x132xf32>, vector<8x132xf32>, vector<8x132xf32>, vector<8x132xf32> -> vector<40x132xf32>
    %12 = vector.extract_strided_slice %0 {offsets = [1, 0, 0], sizes = [1, 8, 132], strides = [1, 1, 1]} : vector<2x8x136xf32> to vector<1x8x132xf32>
    %13 = vector.shape_cast %12 : vector<1x8x132xf32> to vector<8x132xf32>
    %14 = vector.extract_strided_slice %0 {offsets = [1, 0, 1], sizes = [1, 8, 132], strides = [1, 1, 1]} : vector<2x8x136xf32> to vector<1x8x132xf32>
    %15 = vector.shape_cast %14 : vector<1x8x132xf32> to vector<8x132xf32>
    %16 = vector.extract_strided_slice %0 {offsets = [1, 0, 2], sizes = [1, 8, 132], strides = [1, 1, 1]} : vector<2x8x136xf32> to vector<1x8x132xf32>
    %17 = vector.shape_cast %16 : vector<1x8x132xf32> to vector<8x132xf32>
    %18 = vector.extract_strided_slice %0 {offsets = [1, 0, 3], sizes = [1, 8, 132], strides = [1, 1, 1]} : vector<2x8x136xf32> to vector<1x8x132xf32>
    %19 = vector.shape_cast %18 : vector<1x8x132xf32> to vector<8x132xf32>
    %20 = vector.extract_strided_slice %0 {offsets = [1, 0, 4], sizes = [1, 8, 132], strides = [1, 1, 1]} : vector<2x8x136xf32> to vector<1x8x132xf32>
    %21 = vector.shape_cast %20 : vector<1x8x132xf32> to vector<8x132xf32>
    %22 = tpu.concatenate %13, %15, %17, %19, %21 in 0 : vector<8x132xf32>, vector<8x132xf32>, vector<8x132xf32>, vector<8x132xf32>, vector<8x132xf32> -> vector<40x132xf32>
    %23 = tpu.concatenate %11, %22 in 1 : vector<40x132xf32>, vector<40x132xf32> -> vector<40x264xf32>
    %c0_2 = arith.constant 0 : index
    %c0_3 = arith.constant 0 : index
    %24 = vector.load %arg1[%c0_2, %c0_3] : memref<32x40xf32, #tpu.memory_space<vmem>>, vector<32x40xf32>
    %cst = arith.constant dense<0.000000e+00> : vector<32x264xf32>
    %25 = tpu.matmul %24, %23, %cst {dimension_numbers = #tpu.dot_dimension_numbers<[1], [0], [0], [1], [0, 0, 1, 1], [], []>} : vector<32x40xf32>, vector<40x264xf32>, vector<32x264xf32> -> vector<32x264xf32>
    %cst_4 = arith.constant dense<0.000000e+00> : vector<32xf32>
    %26 = vector.multi_reduction <add>, %25, %cst_4 [1] : vector<32x264xf32> to vector<32xf32>
    %27 = vector.shape_cast %26 : vector<32xf32> to vector<32x1xf32>
    %cst_5 = arith.constant 0.0037878789 : f32
    %28 = vector.broadcast %cst_5 : f32 to vector<32x1xf32>
    %29 = arith.mulf %27, %28 : vector<32x1xf32>
    %30 = arith.mulf %25, %25 : vector<32x264xf32>
    %cst_6 = arith.constant dense<0.000000e+00> : vector<32xf32>
    %31 = vector.multi_reduction <add>, %30, %cst_6 [1] : vector<32x264xf32> to vector<32xf32>
    %32 = vector.shape_cast %31 : vector<32xf32> to vector<32x1xf32>
    %cst_7 = arith.constant 0.0037878789 : f32
    %33 = vector.broadcast %cst_7 : f32 to vector<32x1xf32>
    %34 = arith.mulf %32, %33 : vector<32x1xf32>
    %35 = arith.mulf %29, %29 : vector<32x1xf32>
    %36 = arith.subf %34, %35 : vector<32x1xf32>
    %c0_8 = arith.constant 0 : index
    %c0_9 = arith.constant 0 : index
    %c0_10 = arith.constant 0 : index
    %37 = vector.load %arg2[%c0_8, %c0_9, %c0_10] : memref<2x32x1xf32, #tpu.memory_space<vmem>>, vector<1x32x1xf32>
    %38 = vector.shape_cast %37 : vector<1x32x1xf32> to vector<32x1xf32>
    %cst_11 = arith.constant 9.99999974E-6 : f32
    %39 = vector.broadcast %cst_11 : f32 to vector<32x1xf32>
    %40 = arith.addf %36, %39 : vector<32x1xf32>
    %41 = math.rsqrt %40 : vector<32x1xf32>
    %42 = arith.mulf %38, %41 : vector<32x1xf32>
    %c1 = arith.constant 1 : index
    %c0_12 = arith.constant 0 : index
    %c0_13 = arith.constant 0 : index
    %43 = vector.load %arg2[%c1, %c0_12, %c0_13] : memref<2x32x1xf32, #tpu.memory_space<vmem>>, vector<1x32x1xf32>
    %44 = vector.shape_cast %43 : vector<1x32x1xf32> to vector<32x1xf32>
    %45 = arith.mulf %29, %42 : vector<32x1xf32>
    %46 = arith.subf %44, %45 : vector<32x1xf32>
    %47 = vector.broadcast %42 : vector<32x1xf32> to vector<32x264xf32>
    %48 = arith.mulf %25, %47 : vector<32x264xf32>
    %49 = vector.broadcast %46 : vector<32x1xf32> to vector<32x264xf32>
    %50 = arith.addf %48, %49 : vector<32x264xf32>
    %cst_14 = arith.constant 0.000000e+00 : f32
    %51 = vector.broadcast %cst_14 : f32 to vector<32x264xf32>
    %52 = arith.maximumf %50, %51 : vector<32x264xf32>
    %53 = vector.extract_strided_slice %52 {offsets = [0, 0], sizes = [32, 128], strides = [1, 1]} : vector<32x264xf32> to vector<32x128xf32>
    %54 = vector.extract_strided_slice %52 {offsets = [0, 1], sizes = [32, 128], strides = [1, 1]} : vector<32x264xf32> to vector<32x128xf32>
    %55 = vector.extract_strided_slice %52 {offsets = [0, 2], sizes = [32, 128], strides = [1, 1]} : vector<32x264xf32> to vector<32x128xf32>
    %56 = vector.extract_strided_slice %52 {offsets = [0, 3], sizes = [32, 128], strides = [1, 1]} : vector<32x264xf32> to vector<32x128xf32>
    %57 = vector.extract_strided_slice %52 {offsets = [0, 4], sizes = [32, 128], strides = [1, 1]} : vector<32x264xf32> to vector<32x128xf32>
    %58 = tpu.concatenate %53, %54, %55, %56, %57 in 0 : vector<32x128xf32>, vector<32x128xf32>, vector<32x128xf32>, vector<32x128xf32>, vector<32x128xf32> -> vector<160x128xf32>
    %59 = vector.extract_strided_slice %52 {offsets = [0, 132], sizes = [32, 128], strides = [1, 1]} : vector<32x264xf32> to vector<32x128xf32>
    %60 = vector.extract_strided_slice %52 {offsets = [0, 133], sizes = [32, 128], strides = [1, 1]} : vector<32x264xf32> to vector<32x128xf32>
    %61 = vector.extract_strided_slice %52 {offsets = [0, 134], sizes = [32, 128], strides = [1, 1]} : vector<32x264xf32> to vector<32x128xf32>
    %62 = vector.extract_strided_slice %52 {offsets = [0, 135], sizes = [32, 128], strides = [1, 1]} : vector<32x264xf32> to vector<32x128xf32>
    %63 = vector.extract_strided_slice %52 {offsets = [0, 136], sizes = [32, 128], strides = [1, 1]} : vector<32x264xf32> to vector<32x128xf32>
    %64 = tpu.concatenate %59, %60, %61, %62, %63 in 0 : vector<32x128xf32>, vector<32x128xf32>, vector<32x128xf32>, vector<32x128xf32>, vector<32x128xf32> -> vector<160x128xf32>
    %65 = tpu.concatenate %58, %64 in 1 : vector<160x128xf32>, vector<160x128xf32> -> vector<160x256xf32>
    %c0_15 = arith.constant 0 : index
    %c0_16 = arith.constant 0 : index
    %66 = vector.load %arg3[%c0_15, %c0_16] : memref<48x160xf32, #tpu.memory_space<vmem>>, vector<48x160xf32>
    %cst_17 = arith.constant dense<0.000000e+00> : vector<48x256xf32>
    %67 = tpu.matmul %66, %65, %cst_17 {dimension_numbers = #tpu.dot_dimension_numbers<[1], [0], [0], [1], [0, 0, 1, 1], [], []>} : vector<48x160xf32>, vector<160x256xf32>, vector<48x256xf32> -> vector<48x256xf32>
    %cst_18 = arith.constant dense<0.000000e+00> : vector<48xf32>
    %68 = vector.multi_reduction <add>, %67, %cst_18 [1] : vector<48x256xf32> to vector<48xf32>
    %69 = vector.shape_cast %68 : vector<48xf32> to vector<48x1xf32>
    %cst_19 = arith.constant 3.906250e-03 : f32
    %70 = vector.broadcast %cst_19 : f32 to vector<48x1xf32>
    %71 = arith.mulf %69, %70 : vector<48x1xf32>
    %72 = arith.mulf %67, %67 : vector<48x256xf32>
    %cst_20 = arith.constant dense<0.000000e+00> : vector<48xf32>
    %73 = vector.multi_reduction <add>, %72, %cst_20 [1] : vector<48x256xf32> to vector<48xf32>
    %74 = vector.shape_cast %73 : vector<48xf32> to vector<48x1xf32>
    %cst_21 = arith.constant 3.906250e-03 : f32
    %75 = vector.broadcast %cst_21 : f32 to vector<48x1xf32>
    %76 = arith.mulf %74, %75 : vector<48x1xf32>
    %77 = arith.mulf %71, %71 : vector<48x1xf32>
    %78 = arith.subf %76, %77 : vector<48x1xf32>
    %c0_22 = arith.constant 0 : index
    %c0_23 = arith.constant 0 : index
    %c0_24 = arith.constant 0 : index
    %79 = vector.load %arg4[%c0_22, %c0_23, %c0_24] : memref<2x48x1xf32, #tpu.memory_space<vmem>>, vector<1x48x1xf32>
    %80 = vector.shape_cast %79 : vector<1x48x1xf32> to vector<48x1xf32>
    %cst_25 = arith.constant 9.99999974E-6 : f32
    %81 = vector.broadcast %cst_25 : f32 to vector<48x1xf32>
    %82 = arith.addf %78, %81 : vector<48x1xf32>
    %83 = math.rsqrt %82 : vector<48x1xf32>
    %84 = arith.mulf %80, %83 : vector<48x1xf32>
    %c1_26 = arith.constant 1 : index
    %c0_27 = arith.constant 0 : index
    %c0_28 = arith.constant 0 : index
    %85 = vector.load %arg4[%c1_26, %c0_27, %c0_28] : memref<2x48x1xf32, #tpu.memory_space<vmem>>, vector<1x48x1xf32>
    %86 = vector.shape_cast %85 : vector<1x48x1xf32> to vector<48x1xf32>
    %87 = arith.mulf %71, %84 : vector<48x1xf32>
    %88 = arith.subf %86, %87 : vector<48x1xf32>
    %89 = vector.broadcast %84 : vector<48x1xf32> to vector<48x256xf32>
    %90 = arith.mulf %67, %89 : vector<48x256xf32>
    %91 = vector.broadcast %88 : vector<48x1xf32> to vector<48x256xf32>
    %92 = arith.addf %90, %91 : vector<48x256xf32>
    %cst_29 = arith.constant 0.000000e+00 : f32
    %93 = vector.broadcast %cst_29 : f32 to vector<48x256xf32>
    %94 = arith.maximumf %92, %93 : vector<48x256xf32>
    %95 = vector.extract_strided_slice %94 {offsets = [0, 0], sizes = [48, 128], strides = [1, 1]} : vector<48x256xf32> to vector<48x128xf32>
    %c0_30 = arith.constant 0 : index
    %c0_31 = arith.constant 0 : index
    %c0_32 = arith.constant 0 : index
    %96 = vector.load %arg5[%c0_30, %c0_31, %c0_32] : memref<2x48x128xf32, #tpu.memory_space<vmem>>, vector<1x48x128xf32>
    %97 = vector.shape_cast %96 : vector<1x48x128xf32> to vector<48x128xf32>
    %98 = vector.shape_cast %95 : vector<48x128xf32> to vector<1x48x128xf32>
    tpu.vector_store %arg5[%c0_30, %c0_31, %c0_32], %98 {strides = array<i32>} : memref<2x48x128xf32, #tpu.memory_space<vmem>>, vector<1x48x128xf32>,
    %99 = vector.extract_strided_slice %94 {offsets = [0, 128], sizes = [48, 128], strides = [1, 1]} : vector<48x256xf32> to vector<48x128xf32>
    %c1_33 = arith.constant 1 : index
    %c0_34 = arith.constant 0 : index
    %c0_35 = arith.constant 0 : index
    %100 = vector.load %arg5[%c1_33, %c0_34, %c0_35] : memref<2x48x128xf32, #tpu.memory_space<vmem>>, vector<1x48x128xf32>
    %101 = vector.shape_cast %100 : vector<1x48x128xf32> to vector<48x128xf32>
    %102 = vector.shape_cast %99 : vector<48x128xf32> to vector<1x48x128xf32>
    tpu.vector_store %arg5[%c1_33, %c0_34, %c0_35], %102 {strides = array<i32>} : memref<2x48x128xf32, #tpu.memory_space<vmem>>, vector<1x48x128xf32>,
    return
  }
}

</mosaic_0001>

<llo_original>
// kernel: resblock_forward.1
$region0: #{resblock_forward.1}
  #allocation0 [shape = 'u32[]', space=smem, size = 0x4, offset = 0x4, fixed_abs, tag = 'smem constant byte address 0x4 - core index']
  #allocation1 [shape = 'u32[144,128]{1,0:T(1,128)}', space=vmem, size = 0x12000, scoped, tag = 'internal scratch']
  %s0 = inlined_call_operand.vmem [shape: f32[2,8,136], index: 0, kind: input, shape index: {}]
  %s1 = inlined_call_operand.vmem [shape: f32[32,40], index: 1, kind: input, shape index: {}]
  %s2 = inlined_call_operand.vmem [shape: f32[2,32,1], index: 2, kind: input, shape index: {}]
  %s3 = inlined_call_operand.vmem [shape: f32[48,160], index: 3, kind: input, shape index: {}]
  %s4 = inlined_call_operand.vmem [shape: f32[2,48,1], index: 4, kind: input, shape index: {}]
  %s5 = inlined_call_operand.hbm [shape: f32[2,48,128], index: 5, kind: output, shape index: {}]
  %s6 = sld [smem:[#allocation0]]
  $region30: #{resblock_forward.1} parent=0
    _
  %s8 = ssub.s32 1, %s6
  %s9 = scalar_select 0, %s8, %s6
  $region1: #{resblock_forward.1} parent=0
    #allocation2 [shape = 'u8[49152]{0}', space=vmem, size = 0xc000, scoped, tag = 'output window, operand 0, single buffered']
    #allocation3 [shape = 's32[1]{0}', space=sflag, size = 0x4, scoped, tag = 'scoped memory for resblock_forward.1']
    %10 = vsyncpa [#allocation3], 0
    // Predicated region
    $region2: #{resblock_forward.1} parent=1 // pred_check
      _
    $region3: #{resblock_forward.1} parent=1 // pred_check_branch
      %12 = sbr.rel (0) target = $region5
    $region4: #{resblock_forward.1} parent=1 // pred_region
      _
    $region5: #{resblock_forward.1} parent=1 // pred_fallthru
      _
    // Predicated region
    $region6: #{resblock_forward.1} parent=1 // pred_check
      _
    $region7: #{resblock_forward.1} parent=1 // pred_check_branch
      %14 = sbr.rel (0) target = $region9
    $region8: #{resblock_forward.1} parent=1 // pred_region
      _
    $region9: #{resblock_forward.1} parent=1 // pred_fallthru
      _
    // Predicated region
    $region10: #{resblock_forward.1} parent=1 // pred_check
      _
    $region11: #{resblock_forward.1} parent=1 // pred_check_branch
      %16 = sbr.rel (0) target = $region13
    $region12: #{resblock_forward.1} parent=1 // pred_region
      _
    $region13: #{resblock_forward.1} parent=1 // pred_fallthru
      _
    // Predicated region
    $region14: #{resblock_forward.1} parent=1 // pred_check
      _
    $region15: #{resblock_forward.1} parent=1 // pred_check_branch
      %18 = sbr.rel (0) target = $region17
    $region16: #{resblock_forward.1} parent=1 // pred_region
      _
    $region17: #{resblock_forward.1} parent=1 // pred_fallthru
      _
    // Predicated region
    $region18: #{resblock_forward.1} parent=1 // pred_check
      _
    $region19: #{resblock_forward.1} parent=1 // pred_check_branch
      %20 = sbr.rel (0) target = $region21
    $region20: #{resblock_forward.1} parent=1 // pred_region
      _
    $region21: #{resblock_forward.1} parent=1 // pred_fallthru
      _
    %v21 = vld [vmem:[%s0] sm:$0xff]
    %v22 = vld [vmem:[%s0 + $0x8] sm:$0xff]
    %v23 = vld [vmem:[%s0 + $0x10] sm:$0xff]
    %v24 = vld [vmem:[%s0 + $0x18] sm:$0xff]
    %27 = vrot.lane.b32.xlu0 %v21, 127
    %v28 = vpop.permute.xlu0 %27
    %29 = vrot.lane.b32.xlu0 %v22, 127
    %v30 = vpop.permute.xlu0 %29
    %vm31 = vcmask 1039360
    %v32 = vsel %vm31, %v28, %v30
    %35 = vrot.lane.b32.xlu0 %v21, 126
    %v36 = vpop.permute.xlu0 %35
    %37 = vrot.lane.b32.xlu0 %v22, 126
    %v38 = vpop.permute.xlu0 %37
    %vm39 = vcmask 1031168
    %v40 = vsel %vm39, %v36, %v38
    %43 = vrot.lane.b32.xlu0 %v21, 125
    %v44 = vpop.permute.xlu0 %43
    %45 = vrot.lane.b32.xlu0 %v22, 125
    %v46 = vpop.permute.xlu0 %45
    %vm47 = vcmask 1022976
    %v48 = vsel %vm47, %v44, %v46
    %51 = vrot.lane.b32.xlu0 %v21, 124
    %v52 = vpop.permute.xlu0 %51
    %53 = vrot.lane.b32.xlu0 %v22, 124
    %v54 = vpop.permute.xlu0 %53
    %vm55 = vcmask 1014784
    %v56 = vsel %vm55, %v52, %v54
    %61 = vrot.lane.b32.xlu0 %v23, 127
    %v62 = vpop.permute.xlu0 %61
    %63 = vrot.lane.b32.xlu0 %v24, 127
    %v64 = vpop.permute.xlu0 %63
    %v65 = vsel %vm31, %v62, %v64
    %66 = vrot.lane.b32.xlu0 %v23, 126
    %v67 = vpop.permute.xlu0 %66
    %68 = vrot.lane.b32.xlu0 %v24, 126
    %v69 = vpop.permute.xlu0 %68
    %v70 = vsel %vm39, %v67, %v69
    %71 = vrot.lane.b32.xlu0 %v23, 125
    %v72 = vpop.permute.xlu0 %71
    %73 = vrot.lane.b32.xlu0 %v24, 125
    %v74 = vpop.permute.xlu0 %73
    %v75 = vsel %vm47, %v72, %v74
    %76 = vrot.lane.b32.xlu0 %v23, 124
    %v77 = vpop.permute.xlu0 %76
    %78 = vrot.lane.b32.xlu0 %v24, 124
    %v79 = vpop.permute.xlu0 %78
    %v80 = vsel %vm55, %v77, %v79
    %81 = vrot.lane.b32.xlu0 %v23, 4
    %v82 = vpop.permute.xlu0 %81
    %83 = vrot.lane.b32.xlu0 %v24, 4
    %v84 = vpop.permute.xlu0 %83
    %85 = vrot.lane.b32.xlu0 %v65, 4
    %v86 = vpop.permute.xlu0 %85
    %87 = vrot.lane.b32.xlu0 %v64, 4
    %v88 = vpop.permute.xlu0 %87
    %89 = vrot.lane.b32.xlu0 %v70, 4
    %v90 = vpop.permute.xlu0 %89
    %91 = vrot.lane.b32.xlu0 %v69, 4
    %v92 = vpop.permute.xlu0 %91
    %93 = vrot.lane.b32.xlu0 %v75, 4
    %v94 = vpop.permute.xlu0 %93
    %95 = vrot.lane.b32.xlu0 %v74, 4
    %v96 = vpop.permute.xlu0 %95
    %97 = vrot.lane.b32.xlu0 %v80, 4
    %v98 = vpop.permute.xlu0 %97
    %99 = vrot.lane.b32.xlu0 %v79, 4
    %v100 = vpop.permute.xlu0 %99
    %vm101 = vcmask 31744
    %v102 = vsel %vm101, %v82, %v84
    %v103 = vsel %vm101, %v86, %v88
    %v104 = vsel %vm101, %v90, %v92
    %v105 = vsel %vm101, %v94, %v96
    %v106 = vsel %vm101, %v98, %v100
    %v117 = vsel %vm101, %v22, %v82
    %v118 = vsel %vm101, %v30, %v86
    %v119 = vsel %vm101, %v38, %v90
    %v120 = vsel %vm101, %v46, %v94
    %v121 = vsel %vm101, %v54, %v98
    %v122 = vld [vmem:[%s1] sm:$0xff]
    %v123 = vld [vmem:[%s1 + $0x8] sm:$0xff]
    %v124 = vld [vmem:[%s1 + $0x10] sm:$0xff]
    %v125 = vld [vmem:[%s1 + $0x18] sm:$0xff]
    %vm126 = vcmask 326656
    %v128 = vsel %vm126, %v122, 0
    %v131 = vsel %vm126, %v123, 0
    %v134 = vsel %vm126, %v124, 0
    %v137 = vsel %vm126, %v125, 0
    %139 = vmatprep.subr.mxu0 %v117
    %140 = vmatpush1.msra.mxu0 %v21
    %141 = vmatprep.subr.mxu0 %v118
    %142 = vmatpush1.msra.mxu0 %v32
    %143 = vmatprep.subr.mxu0 %v119
    %144 = vmatpush1.msra.mxu0 %v40
    %145 = vmatprep.subr.mxu0 %v120
    %146 = vmatpush1.msra.mxu0 %v48
    %147 = vmatprep.subr.mxu0 %v121
    %148 = vmatpush1.msra.mxu0 %v56
    %149 = vmatprep.subr.mxu0 0.0
    %150 = vmatpush1.msra.mxu0 0.0
    %151 = vmatprep.subr.mxu0 0.0
    %152 = vmatpush1.msra.mxu0 0.0
    %153 = vmatprep.subr.mxu0 0.0
    %154 = vmatpush1.msra.mxu0 0.0
    %155 = vmatprep.subr.mxu0 0.0
    %156 = vmatpush1.msra.mxu0 0.0
    %157 = vmatprep.subr.mxu0 0.0
    %158 = vmatpush1.msra.mxu0 0.0
    %159 = vmatprep.subr.mxu0 0.0
    %160 = vmatpush1.msra.mxu0 0.0
    %161 = vmatprep.subr.mxu0 0.0
    %162 = vmatpush1.msra.mxu0 0.0
    %163 = vmatprep.subr.mxu0 0.0
    %164 = vmatpush1.msra.mxu0 0.0
    %165 = vmatprep.subr.mxu0 0.0
    %166 = vmatpush1.msra.mxu0 0.0
    %167 = vmatprep.subr.mxu0 0.0
    %168 = vmatpush1.msra.mxu0 0.0
    %169 = vmatprep.subr.mxu0 0.0
    %170 = vmatpush1.msra.mxu0 0.0
    %171 = vmatprep.subr.mxu0 0.0
    %172 = vmatpush1.msra.mxu0 0.0
    %173 = vmatprep.subr.mxu0 0.0
    %174 = vmatpush1.msra.mxu0 0.0
    %175 = vmatprep.subr.mxu0 0.0
    %176 = vmatpush1.msra.mxu0 0.0
    %177 = vmatprep.subr.mxu0 0.0
    %178 = vmatpush1.msra.mxu0 0.0
    %179 = vmatprep.subr.mxu0 0.0
    %180 = vmatpush1.msra.mxu0 0.0
    %181 = vmatprep.subr.mxu0 0.0
    %182 = vmatpush1.msra.mxu0 0.0
    %183 = vmatprep.subr.mxu0 0.0
    %184 = vmatpush1.msra.mxu0 0.0
    %185 = vmatprep.subr.mxu0 0.0
    %186 = vmatpush1.msra.mxu0 0.0
    %187 = vmatprep.subr.mxu0 0.0
    %188 = vmatpush1.msra.mxu0 0.0
    %189 = vmatprep.subr.mxu0 0.0
    %190 = vmatpush1.msra.mxu0 0.0
    %191 = vmatprep.subr.mxu0 0.0
    %192 = vmatpush1.msra.mxu0 0.0
    %193 = vmatprep.subr.mxu0 0.0
    %194 = vmatpush1.msra.mxu0 0.0
    %195 = vmatprep.subr.mxu0 0.0
    %196 = vmatpush1.msra.mxu0 0.0
    %197 = vmatprep.subr.mxu0 0.0
    %198 = vmatpush1.msra.mxu0 0.0
    %199 = vmatprep.subr.mxu0 0.0
    %200 = vmatpush1.msra.mxu0 0.0
    %201 = vmatprep.subr.mxu0 0.0
    %202 = vmatpush1.msra.mxu0 0.0
    %203 = vmatprep.mubr.f32.mxu0 0.0
    %204 = vmatmul.mubr.f32.gmra.mrb[0].mxu0 %v128
    %v205 = vpop.f32.mrb[0].mxu0
    %v206 = vadd.f32 0.0, %v205
    %v207 = vpop.f32.mrb[0].mxu0
    %v208 = vadd.f32 0.0, %v207
    %209 = vmatprep.mubr.f32.mxu0 0.0
    %210 = vmatmul.mubr.f32.gmra.mrb[0].mxu0 %v131
    %v211 = vpop.f32.mrb[0].mxu0
    %v212 = vadd.f32 0.0, %v211
    %v213 = vpop.f32.mrb[0].mxu0
    %v214 = vadd.f32 0.0, %v213
    %215 = vmatprep.mubr.f32.mxu0 0.0
    %216 = vmatmul.mubr.f32.gmra.mrb[0].mxu0 %v134
    %v217 = vpop.f32.mrb[0].mxu0
    %v218 = vadd.f32 0.0, %v217
    %v219 = vpop.f32.mrb[0].mxu0
    %v220 = vadd.f32 0.0, %v219
    %221 = vmatprep.mubr.f32.mxu0 0.0
    %222 = vmatmul.mubr.f32.gmra.mrb[0].mxu0 %v137
    %v223 = vpop.f32.mrb[0].mxu0
    %v224 = vadd.f32 0.0, %v223
    %v225 = vpop.f32.mrb[0].mxu0
    %v226 = vadd.f32 0.0, %v225
    %227 = vdwg.mxu0
    %228 = vmatprep.subr.mxu0 0.0
    %229 = vmatpush1.msra.mxu0 %v102
    %230 = vmatprep.subr.mxu0 0.0
    %231 = vmatpush1.msra.mxu0 %v103
    %232 = vmatprep.subr.mxu0 0.0
    %233 = vmatpush1.msra.mxu0 %v104
    %234 = vmatprep.subr.mxu0 0.0
    %235 = vmatpush1.msra.mxu0 %v105
    %236 = vmatprep.subr.mxu0 0.0
    %237 = vmatpush1.msra.mxu0 %v106
    %238 = vmatprep.subr.mxu0 0.0
    %239 = vmatpush1.msra.mxu0 0.0
    %240 = vmatprep.subr.mxu0 0.0
    %241 = vmatpush1.msra.mxu0 0.0
    %242 = vmatprep.subr.mxu0 0.0
    %243 = vmatpush1.msra.mxu0 0.0
    %244 = vmatprep.subr.mxu0 0.0
    %245 = vmatpush1.msra.mxu0 0.0
    %246 = vmatprep.subr.mxu0 0.0
    %247 = vmatpush1.msra.mxu0 0.0
    %248 = vmatprep.subr.mxu0 0.0
    %249 = vmatpush1.msra.mxu0 0.0
    %250 = vmatprep.subr.mxu0 0.0
    %251 = vmatpush1.msra.mxu0 0.0
    %252 = vmatprep.subr.mxu0 0.0
    %253 = vmatpush1.msra.mxu0 0.0
    %254 = vmatprep.subr.mxu0 0.0
    %255 = vmatpush1.msra.mxu0 0.0
    %256 = vmatprep.subr.mxu0 0.0
    %257 = vmatpush1.msra.mxu0 0.0
    %258 = vmatprep.subr.mxu0 0.0
    %259 = vmatpush1.msra.mxu0 0.0
    %260 = vmatprep.subr.mxu0 0.0
    %261 = vmatpush1.msra.mxu0 0.0
    %262 = vmatprep.subr.mxu0 0.0
    %263 = vmatpush1.msra.mxu0 0.0
    %264 = vmatprep.subr.mxu0 0.0
    %265 = vmatpush1.msra.mxu0 0.0
    %266 = vmatprep.subr.mxu0 0.0
    %267 = vmatpush1.msra.mxu0 0.0
    %268 = vmatprep.subr.mxu0 0.0
    %269 = vmatpush1.msra.mxu0 0.0
    %270 = vmatprep.subr.mxu0 0.0
    %271 = vmatpush1.msra.mxu0 0.0
    %272 = vmatprep.subr.mxu0 0.0
    %273 = vmatpush1.msra.mxu0 0.0
    %274 = vmatprep.subr.mxu0 0.0
    %275 = vmatpush1.msra.mxu0 0.0
    %276 = vmatprep.subr.mxu0 0.0
    %277 = vmatpush1.msra.mxu0 0.0
    %278 = vmatprep.subr.mxu0 0.0
    %279 = vmatpush1.msra.mxu0 0.0
    %280 = vmatprep.subr.mxu0 0.0
    %281 = vmatpush1.msra.mxu0 0.0
    %282 = vmatprep.subr.mxu0 0.0
    %283 = vmatpush1.msra.mxu0 0.0
    %284 = vmatprep.subr.mxu0 0.0
    %285 = vmatpush1.msra.mxu0 0.0
    %286 = vmatprep.subr.mxu0 0.0
    %287 = vmatpush1.msra.mxu0 0.0
    %288 = vmatprep.subr.mxu0 0.0
    %289 = vmatpush1.msra.mxu0 0.0
    %290 = vmatprep.subr.mxu0 0.0
    %291 = vmatpush1.msra.mxu0 0.0
    %292 = vmatprep.mubr.f32.mxu0 0.0
    %293 = vmatmul.mubr.f32.gmra.mrb[0].mxu0 %v128
    %v294 = vpop.f32.mrb[0].mxu0
    %v295 = vadd.f32 0.0, %v294
    %v296 = vpop.f32.mrb[0].mxu0
    %297 = vmatprep.mubr.f32.mxu0 0.0
    %298 = vmatmul.mubr.f32.gmra.mrb[0].mxu0 %v131
    %v299 = vpop.f32.mrb[0].mxu0
    %v300 = vadd.f32 0.0, %v299
    %v301 = vpop.f32.mrb[0].mxu0
    %302 = vmatprep.mubr.f32.mxu0 0.0
    %303 = vmatmul.mubr.f32.gmra.mrb[0].mxu0 %v134
    %v304 = vpop.f32.mrb[0].mxu0
    %v305 = vadd.f32 0.0, %v304
    %v306 = vpop.f32.mrb[0].mxu0
    %307 = vmatprep.mubr.f32.mxu0 0.0
    %308 = vmatmul.mubr.f32.gmra.mrb[0].mxu0 %v137
    %v309 = vpop.f32.mrb[0].mxu0
    %v310 = vadd.f32 0.0, %v309
    %v311 = vpop.f32.mrb[0].mxu0
    %312 = vdwg.mxu0
    %v313 = vadd.f32 %v206, %v208
    %vm314 = vcmask 64512
    %v315 = vsel %vm314, %v295, 0.0
    %v316 = vadd.f32 %v313, %v315
    %317 = vadd.xlane.f32.xlu0 %v316
    %v318 = vpop.xlane.xlu0 %317
    %v319 = vadd.f32 %v212, %v214
    %v320 = vsel %vm314, %v300, 0.0
    %v321 = vadd.f32 %v319, %v320
    %322 = vadd.xlane.f32.xlu0 %v321
    %v323 = vpop.xlane.xlu0 %322
    %v324 = vadd.f32 %v218, %v220
    %v325 = vsel %vm314, %v305, 0.0
    %v326 = vadd.f32 %v324, %v325
    %327 = vadd.xlane.f32.xlu0 %v326
    %v328 = vpop.xlane.xlu0 %327
    %v329 = vadd.f32 %v224, %v226
    %v330 = vsel %vm314, %v310, 0.0
    %v331 = vadd.f32 %v329, %v330
    %332 = vadd.xlane.f32.xlu0 %v331
    %v333 = vpop.xlane.xlu0 %332
    %v334 = vmul.f32 %v318, 0.003787879
    %v335 = vmul.f32 %v323, 0.003787879
    %v336 = vmul.f32 %v328, 0.003787879
    %v337 = vmul.f32 %v333, 0.003787879
    %v338 = vmul.f32 %v206, %v206
    %v339 = vmul.f32 %v208, %v208
    %v340 = vmul.f32 %v295, %v295
    %v341 = vmul.f32 %v212, %v212
    %v342 = vmul.f32 %v214, %v214
    %v343 = vmul.f32 %v300, %v300
    %v344 = vmul.f32 %v218, %v218
    %v345 = vmul.f32 %v220, %v220
    %v346 = vmul.f32 %v305, %v305
    %v347 = vmul.f32 %v224, %v224
    %v348 = vmul.f32 %v226, %v226
    %v349 = vmul.f32 %v310, %v310
    %v350 = vadd.f32 %v338, %v339
    %v351 = vsel %vm314, %v340, 0.0
    %v352 = vadd.f32 %v350, %v351
    %353 = vadd.xlane.f32.xlu0 %v352
    %v354 = vpop.xlane.xlu0 %353
    %v355 = vadd.f32 %v341, %v342
    %v356 = vsel %vm314, %v343, 0.0
    %v357 = vadd.f32 %v355, %v356
    %358 = vadd.xlane.f32.xlu0 %v357
    %v359 = vpop.xlane.xlu0 %358
    %v360 = vadd.f32 %v344, %v345
    %v361 = vsel %vm314, %v346, 0.0
    %v362 = vadd.f32 %v360, %v361
    %363 = vadd.xlane.f32.xlu0 %v362
    %v364 = vpop.xlane.xlu0 %363
    %v365 = vadd.f32 %v347, %v348
    %v366 = vsel %vm314, %v349, 0.0
    %v367 = vadd.f32 %v365, %v366
    %368 = vadd.xlane.f32.xlu0 %v367
    %v369 = vpop.xlane.xlu0 %368
    %v370 = vmul.f32 %v354, 0.003787879
    %v371 = vmul.f32 %v359, 0.003787879
    %v372 = vmul.f32 %v364, 0.003787879
    %v373 = vmul.f32 %v369, 0.003787879
    %v374 = vmul.f32 %v334, %v334
    %v375 = vmul.f32 %v335, %v335
    %v376 = vmul.f32 %v336, %v336
    %v377 = vmul.f32 %v337, %v337
    %v378 = vsub.f32 %v370, %v374
    %v379 = vsub.f32 %v371, %v375
    %v380 = vsub.f32 %v372, %v376
    %v381 = vsub.f32 %v373, %v377
    %v382 = vld [vmem:[%s2] sm:$0xff]
    %v383 = vld [vmem:[%s2 + $0x8] sm:$0xff]
    %v384 = vld [vmem:[%s2 + $0x10] sm:$0xff]
    %v385 = vld [vmem:[%s2 + $0x18] sm:$0xff]
    %v386 = vadd.f32 %v378, 1e-05
    %v387 = vadd.f32 %v379, 1e-05
    %v388 = vadd.f32 %v380, 1e-05
    %v389 = vadd.f32 %v381, 1e-05
    %v390 = vrsqrt.pop %v386
    %v391 = vrsqrt.pop %v387
    %v392 = vrsqrt.pop %v388
    %v393 = vrsqrt.pop %v389
    %v394 = vmul.f32 %v382, %v390
    %v395 = vmul.f32 %v383, %v391
    %v396 = vmul.f32 %v384, %v392
    %v397 = vmul.f32 %v385, %v393
    %s398 = scalar_lea.vmem %s2, 32
    %v399 = vld [vmem:[%s398] sm:$0xff]
    %v400 = vld [vmem:[%s398 + $0x8] sm:$0xff]
    %v401 = vld [vmem:[%s398 + $0x10] sm:$0xff]
    %v402 = vld [vmem:[%s398 + $0x18] sm:$0xff]
    %v403 = vmul.f32 %v334, %v394
    %v404 = vmul.f32 %v335, %v395
    %v405 = vmul.f32 %v336, %v396
    %v406 = vmul.f32 %v337, %v397
    %v407 = vsub.f32 %v399, %v403
    %v408 = vsub.f32 %v400, %v404
    %v409 = vsub.f32 %v401, %v405
    %v410 = vsub.f32 %v402, %v406
    %412 = vset.pattern.permute.xlu0 0
    %413 = vperm.xlu0 %412, %v394
    %v414 = vpop.permute.xlu0 %413
    %417 = vset.pattern.permute.xlu0 0
    %418 = vperm.xlu0 %417, %v395
    %v419 = vpop.permute.xlu0 %418
    %422 = vset.pattern.permute.xlu0 0
    %423 = vperm.xlu0 %422, %v396
    %v424 = vpop.permute.xlu0 %423
    %427 = vset.pattern.permute.xlu0 0
    %428 = vperm.xlu0 %427, %v397
    %v429 = vpop.permute.xlu0 %428
    %v431 = vmul.f32 %v206, %v414
    %v432 = vmul.f32 %v208, %v414
    %v433 = vmul.f32 %v295, %v414
    %v434 = vmul.f32 %v212, %v419
    %v435 = vmul.f32 %v214, %v419
    %v436 = vmul.f32 %v300, %v419
    %v437 = vmul.f32 %v218, %v424
    %v438 = vmul.f32 %v220, %v424
    %v439 = vmul.f32 %v305, %v424
    %v440 = vmul.f32 %v224, %v429
    %v441 = vmul.f32 %v226, %v429
    %v442 = vmul.f32 %v310, %v429
    %444 = vset.pattern.permute.xlu0 0
    %445 = vperm.xlu0 %444, %v407
    %v446 = vpop.permute.xlu0 %445
    %449 = vset.pattern.permute.xlu0 0
    %450 = vperm.xlu0 %449, %v408
    %v451 = vpop.permute.xlu0 %450
    %454 = vset.pattern.permute.xlu0 0
    %455 = vperm.xlu0 %454, %v409
    %v456 = vpop.permute.xlu0 %455
    %459 = vset.pattern.permute.xlu0 0
    %460 = vperm.xlu0 %459, %v410
    %v461 = vpop.permute.xlu0 %460
    %v463 = vadd.f32 %v431, %v446
    %v464 = vadd.f32 %v432, %v446
    %v465 = vadd.f32 %v433, %v446
    %v466 = vadd.f32 %v434, %v451
    %v467 = vadd.f32 %v435, %v451
    %v468 = vadd.f32 %v436, %v451
    %v469 = vadd.f32 %v437, %v456
    %v470 = vadd.f32 %v438, %v456
    %v471 = vadd.f32 %v439, %v456
    %v472 = vadd.f32 %v440, %v461
    %v473 = vadd.f32 %v441, %v461
    %v474 = vadd.f32 %v442, %v461
    %v475 = vmax.f32 %v463, 0.0
    %v476 = vmax.f32 %v464, 0.0
    %v477 = vmax.f32 %v465, 0.0
    %v478 = vmax.f32 %v466, 0.0
    %v479 = vmax.f32 %v467, 0.0
    %v480 = vmax.f32 %v468, 0.0
    %v481 = vmax.f32 %v469, 0.0
    %v482 = vmax.f32 %v470, 0.0
    %v483 = vmax.f32 %v471, 0.0
    %v484 = vmax.f32 %v472, 0.0
    %v485 = vmax.f32 %v473, 0.0
    %v486 = vmax.f32 %v474, 0.0
    %495 = vrot.lane.b32.xlu0 %v475, 127
    %v496 = vpop.permute.xlu0 %495
    %497 = vrot.lane.b32.xlu0 %v476, 127
    %v498 = vpop.permute.xlu0 %497
    %499 = vrot.lane.b32.xlu0 %v478, 127
    %v500 = vpop.permute.xlu0 %499
    %501 = vrot.lane.b32.xlu0 %v479, 127
    %v502 = vpop.permute.xlu0 %501
    %503 = vrot.lane.b32.xlu0 %v481, 127
    %v504 = vpop.permute.xlu0 %503
    %505 = vrot.lane.b32.xlu0 %v482, 127
    %v506 = vpop.permute.xlu0 %505
    %507 = vrot.lane.b32.xlu0 %v484, 127
    %v508 = vpop.permute.xlu0 %507
    %509 = vrot.lane.b32.xlu0 %v485, 127
    %v510 = vpop.permute.xlu0 %509
    %v511 = vsel %vm31, %v496, %v498
    %v512 = vsel %vm31, %v500, %v502
    %v513 = vsel %vm31, %v504, %v506
    %v514 = vsel %vm31, %v508, %v510
    %519 = vrot.lane.b32.xlu0 %v475, 126
    %v520 = vpop.permute.xlu0 %519
    %521 = vrot.lane.b32.xlu0 %v476, 126
    %v522 = vpop.permute.xlu0 %521
    %523 = vrot.lane.b32.xlu0 %v478, 126
    %v524 = vpop.permute.xlu0 %523
    %525 = vrot.lane.b32.xlu0 %v479, 126
    %v526 = vpop.permute.xlu0 %525
    %527 = vrot.lane.b32.xlu0 %v481, 126
    %v528 = vpop.permute.xlu0 %527
    %529 = vrot.lane.b32.xlu0 %v482, 126
    %v530 = vpop.permute.xlu0 %529
    %531 = vrot.lane.b32.xlu0 %v484, 126
    %v532 = vpop.permute.xlu0 %531
    %533 = vrot.lane.b32.xlu0 %v485, 126
    %v534 = vpop.permute.xlu0 %533
    %v535 = vsel %vm39, %v520, %v522
    %v536 = vsel %vm39, %v524, %v526
    %v537 = vsel %vm39, %v528, %v530
    %v538 = vsel %vm39, %v532, %v534
    %543 = vrot.lane.b32.xlu0 %v475, 125
    %v544 = vpop.permute.xlu0 %543
    %545 = vrot.lane.b32.xlu0 %v476, 125
    %v546 = vpop.permute.xlu0 %545
    %547 = vrot.lane.b32.xlu0 %v478, 125
    %v548 = vpop.permute.xlu0 %547
    %549 = vrot.lane.b32.xlu0 %v479, 125
    %v550 = vpop.permute.xlu0 %549
    %551 = vrot.lane.b32.xlu0 %v481, 125
    %v552 = vpop.permute.xlu0 %551
    %553 = vrot.lane.b32.xlu0 %v482, 125
    %v554 = vpop.permute.xlu0 %553
    %555 = vrot.lane.b32.xlu0 %v484, 125
    %v556 = vpop.permute.xlu0 %555
    %557 = vrot.lane.b32.xlu0 %v485, 125
    %v558 = vpop.permute.xlu0 %557
    %v559 = vsel %vm47, %v544, %v546
    %v560 = vsel %vm47, %v548, %v550
    %v561 = vsel %vm47, %v552, %v554
    %v562 = vsel %vm47, %v556, %v558
    %567 = vrot.lane.b32.xlu0 %v475, 124
    %v568 = vpop.permute.xlu0 %567
    %569 = vrot.lane.b32.xlu0 %v476, 124
    %v570 = vpop.permute.xlu0 %569
    %571 = vrot.lane.b32.xlu0 %v478, 124
    %v572 = vpop.permute.xlu0 %571
    %573 = vrot.lane.b32.xlu0 %v479, 124
    %v574 = vpop.permute.xlu0 %573
    %575 = vrot.lane.b32.xlu0 %v481, 124
    %v576 = vpop.permute.xlu0 %575
    %577 = vrot.lane.b32.xlu0 %v482, 124
    %v578 = vpop.permute.xlu0 %577
    %579 = vrot.lane.b32.xlu0 %v484, 124
    %v580 = vpop.permute.xlu0 %579
    %581 = vrot.lane.b32.xlu0 %v485, 124
    %v582 = vpop.permute.xlu0 %581
    %v583 = vsel %vm55, %v568, %v570
    %v584 = vsel %vm55, %v572, %v574
    %v585 = vsel %vm55, %v576, %v578
    %v586 = vsel %vm55, %v580, %v582
    %595 = vrot.lane.b32.xlu0 %v477, 127
    %v596 = vpop.permute.xlu0 %595
    %597 = vrot.lane.b32.xlu0 %v480, 127
    %v598 = vpop.permute.xlu0 %597
    %599 = vrot.lane.b32.xlu0 %v483, 127
    %v600 = vpop.permute.xlu0 %599
    %601 = vrot.lane.b32.xlu0 %v486, 127
    %v602 = vpop.permute.xlu0 %601
    %v603 = vsel %vm31, %v498, %v596
    %v604 = vsel %vm31, %v502, %v598
    %v605 = vsel %vm31, %v506, %v600
    %v606 = vsel %vm31, %v510, %v602
    %607 = vrot.lane.b32.xlu0 %v477, 126
    %v608 = vpop.permute.xlu0 %607
    %609 = vrot.lane.b32.xlu0 %v480, 126
    %v610 = vpop.permute.xlu0 %609
    %611 = vrot.lane.b32.xlu0 %v483, 126
    %v612 = vpop.permute.xlu0 %611
    %613 = vrot.lane.b32.xlu0 %v486, 126
    %v614 = vpop.permute.xlu0 %613
    %v615 = vsel %vm39, %v522, %v608
    %v616 = vsel %vm39, %v526, %v610
    %v617 = vsel %vm39, %v530, %v612
    %v618 = vsel %vm39, %v534, %v614
    %619 = vrot.lane.b32.xlu0 %v477, 125
    %v620 = vpop.permute.xlu0 %619
    %621 = vrot.lane.b32.xlu0 %v480, 125
    %v622 = vpop.permute.xlu0 %621
    %623 = vrot.lane.b32.xlu0 %v483, 125
    %v624 = vpop.permute.xlu0 %623
    %625 = vrot.lane.b32.xlu0 %v486, 125
    %v626 = vpop.permute.xlu0 %625
    %v627 = vsel %vm47, %v546, %v620
    %v628 = vsel %vm47, %v550, %v622
    %v629 = vsel %vm47, %v554, %v624
    %v630 = vsel %vm47, %v558, %v626
    %631 = vrot.lane.b32.xlu0 %v477, 124
    %v632 = vpop.permute.xlu0 %631
    %633 = vrot.lane.b32.xlu0 %v480, 124
    %v634 = vpop.permute.xlu0 %633
    %635 = vrot.lane.b32.xlu0 %v483, 124
    %v636 = vpop.permute.xlu0 %635
    %637 = vrot.lane.b32.xlu0 %v486, 124
    %v638 = vpop.permute.xlu0 %637
    %v639 = vsel %vm55, %v570, %v632
    %v640 = vsel %vm55, %v574, %v634
    %v641 = vsel %vm55, %v578, %v636
    %v642 = vsel %vm55, %v582, %v638
    %643 = vrot.lane.b32.xlu0 %v603, 124
    %v644 = vpop.permute.xlu0 %643
    %645 = vrot.lane.b32.xlu0 %v596, 124
    %v646 = vpop.permute.xlu0 %645
    %647 = vrot.lane.b32.xlu0 %v604, 124
    %v648 = vpop.permute.xlu0 %647
    %649 = vrot.lane.b32.xlu0 %v598, 124
    %v650 = vpop.permute.xlu0 %649
    %651 = vrot.lane.b32.xlu0 %v605, 124
    %v652 = vpop.permute.xlu0 %651
    %653 = vrot.lane.b32.xlu0 %v600, 124
    %v654 = vpop.permute.xlu0 %653
    %655 = vrot.lane.b32.xlu0 %v606, 124
    %v656 = vpop.permute.xlu0 %655
    %657 = vrot.lane.b32.xlu0 %v602, 124
    %v658 = vpop.permute.xlu0 %657
    %659 = vrot.lane.b32.xlu0 %v615, 124
    %v660 = vpop.permute.xlu0 %659
    %661 = vrot.lane.b32.xlu0 %v608, 124
    %v662 = vpop.permute.xlu0 %661
    %663 = vrot.lane.b32.xlu0 %v616, 124
    %v664 = vpop.permute.xlu0 %663
    %665 = vrot.lane.b32.xlu0 %v610, 124
    %v666 = vpop.permute.xlu0 %665
    %667 = vrot.lane.b32.xlu0 %v617, 124
    %v668 = vpop.permute.xlu0 %667
    %669 = vrot.lane.b32.xlu0 %v612, 124
    %v670 = vpop.permute.xlu0 %669
    %671 = vrot.lane.b32.xlu0 %v618, 124
    %v672 = vpop.permute.xlu0 %671
    %673 = vrot.lane.b32.xlu0 %v614, 124
    %v674 = vpop.permute.xlu0 %673
    %675 = vrot.lane.b32.xlu0 %v627, 124
    %v676 = vpop.permute.xlu0 %675
    %677 = vrot.lane.b32.xlu0 %v620, 124
    %v678 = vpop.permute.xlu0 %677
    %679 = vrot.lane.b32.xlu0 %v628, 124
    %v680 = vpop.permute.xlu0 %679
    %681 = vrot.lane.b32.xlu0 %v622, 124
    %v682 = vpop.permute.xlu0 %681
    %683 = vrot.lane.b32.xlu0 %v629, 124
    %v684 = vpop.permute.xlu0 %683
    %685 = vrot.lane.b32.xlu0 %v624, 124
    %v686 = vpop.permute.xlu0 %685
    %687 = vrot.lane.b32.xlu0 %v630, 124
    %v688 = vpop.permute.xlu0 %687
    %689 = vrot.lane.b32.xlu0 %v626, 124
    %v690 = vpop.permute.xlu0 %689
    %691 = vrot.lane.b32.xlu0 %v639, 124
    %v692 = vpop.permute.xlu0 %691
    %693 = vrot.lane.b32.xlu0 %v632, 124
    %v694 = vpop.permute.xlu0 %693
    %695 = vrot.lane.b32.xlu0 %v640, 124
    %v696 = vpop.permute.xlu0 %695
    %697 = vrot.lane.b32.xlu0 %v634, 124
    %v698 = vpop.permute.xlu0 %697
    %699 = vrot.lane.b32.xlu0 %v641, 124
    %v700 = vpop.permute.xlu0 %699
    %701 = vrot.lane.b32.xlu0 %v636, 124
    %v702 = vpop.permute.xlu0 %701
    %703 = vrot.lane.b32.xlu0 %v642, 124
    %v704 = vpop.permute.xlu0 %703
    %705 = vrot.lane.b32.xlu0 %v638, 124
    %v706 = vpop.permute.xlu0 %705
    %v707 = vsel %vm55, %v644, %v646
    %v708 = vsel %vm55, %v648, %v650
    %v709 = vsel %vm55, %v652, %v654
    %v710 = vsel %vm55, %v656, %v658
    %v711 = vsel %vm55, %v660, %v662
    %v712 = vsel %vm55, %v664, %v666
    %v713 = vsel %vm55, %v668, %v670
    %v714 = vsel %vm55, %v672, %v674
    %v715 = vsel %vm55, %v676, %v678
    %v716 = vsel %vm55, %v680, %v682
    %v717 = vsel %vm55, %v684, %v686
    %v718 = vsel %vm55, %v688, %v690
    %v719 = vsel %vm55, %v692, %v694
    %v720 = vsel %vm55, %v696, %v698
    %v721 = vsel %vm55, %v700, %v702
    %v722 = vsel %vm55, %v704, %v706
    %v743 = vld [vmem:[%s3] sm:$0xff]
    %v744 = vld [vmem:[%s3 + $0x8] sm:$0xff]
    %v745 = vld [vmem:[%s3 + $0x10] sm:$0xff]
    %v746 = vld [vmem:[%s3 + $0x18] sm:$0xff]
    %v747 = vld [vmem:[%s3 + $0x20] sm:$0xff]
    %v748 = vld [vmem:[%s3 + $0x28] sm:$0xff]
    %v749 = vld [vmem:[%s3 + $0x30] sm:$0xff]
    %v750 = vld [vmem:[%s3 + $0x38] sm:$0xff]
    %v751 = vld [vmem:[%s3 + $0x40] sm:$0xff]
    %v752 = vld [vmem:[%s3 + $0x48] sm:$0xff]
    %v753 = vld [vmem:[%s3 + $0x50] sm:$0xff]
    %v754 = vld [vmem:[%s3 + $0x58] sm:$0xff]
    %vm755 = vcmask 261120
    %v757 = vsel %vm755, %v744, 0
    %v760 = vsel %vm755, %v746, 0
    %v763 = vsel %vm755, %v748, 0
    %v766 = vsel %vm755, %v750, 0
    %v769 = vsel %vm755, %v752, 0
    %v772 = vsel %vm755, %v754, 0
    %774 = vmatprep.subr.mxu0 %v639
    %775 = vmatpush1.msra.mxu0 %v475
    %776 = vmatprep.subr.mxu0 %v640
    %777 = vmatpush1.msra.mxu0 %v478
    %778 = vmatprep.subr.mxu0 %v641
    %779 = vmatpush1.msra.mxu0 %v481
    %780 = vmatprep.subr.mxu0 %v642
    %781 = vmatpush1.msra.mxu0 %v484
    %782 = vmatprep.subr.mxu0 %v707
    %783 = vmatpush1.msra.mxu0 %v511
    %784 = vmatprep.subr.mxu0 %v708
    %785 = vmatpush1.msra.mxu0 %v512
    %786 = vmatprep.subr.mxu0 %v709
    %787 = vmatpush1.msra.mxu0 %v513
    %788 = vmatprep.subr.mxu0 %v710
    %789 = vmatpush1.msra.mxu0 %v514
    %790 = vmatprep.subr.mxu0 %v711
    %791 = vmatpush1.msra.mxu0 %v535
    %792 = vmatprep.subr.mxu0 %v712
    %793 = vmatpush1.msra.mxu0 %v536
    %794 = vmatprep.subr.mxu0 %v713
    %795 = vmatpush1.msra.mxu0 %v537
    %796 = vmatprep.subr.mxu0 %v714
    %797 = vmatpush1.msra.mxu0 %v538
    %798 = vmatprep.subr.mxu0 %v715
    %799 = vmatpush1.msra.mxu0 %v559
    %800 = vmatprep.subr.mxu0 %v716
    %801 = vmatpush1.msra.mxu0 %v560
    %802 = vmatprep.subr.mxu0 %v717
    %803 = vmatpush1.msra.mxu0 %v561
    %804 = vmatprep.subr.mxu0 %v718
    %805 = vmatpush1.msra.mxu0 %v562
    %806 = vmatprep.subr.mxu0 %v719
    %807 = vmatpush1.msra.mxu0 %v583
    %808 = vmatprep.subr.mxu0 %v720
    %809 = vmatpush1.msra.mxu0 %v584
    %810 = vmatprep.subr.mxu0 %v721
    %811 = vmatpush1.msra.mxu0 %v585
    %812 = vmatprep.subr.mxu0 %v722
    %813 = vmatpush1.msra.mxu0 %v586
    %814 = vmatprep.subr.mxu0 0.0
    %815 = vmatpush1.msra.mxu0 0.0
    %816 = vmatprep.subr.mxu0 0.0
    %817 = vmatpush1.msra.mxu0 0.0
    %818 = vmatprep.subr.mxu0 0.0
    %819 = vmatpush1.msra.mxu0 0.0
    %820 = vmatprep.subr.mxu0 0.0
    %821 = vmatpush1.msra.mxu0 0.0
    %822 = vmatprep.subr.mxu0 0.0
    %823 = vmatpush1.msra.mxu0 0.0
    %824 = vmatprep.subr.mxu0 0.0
    %825 = vmatpush1.msra.mxu0 0.0
    %826 = vmatprep.subr.mxu0 0.0
    %827 = vmatpush1.msra.mxu0 0.0
    %828 = vmatprep.subr.mxu0 0.0
    %829 = vmatpush1.msra.mxu0 0.0
    %830 = vmatprep.subr.mxu0 0.0
    %831 = vmatpush1.msra.mxu0 0.0
    %832 = vmatprep.subr.mxu0 0.0
    %833 = vmatpush1.msra.mxu0 0.0
    %834 = vmatprep.subr.mxu0 0.0
    %835 = vmatpush1.msra.mxu0 0.0
    %836 = vmatprep.subr.mxu0 0.0
    %837 = vmatpush1.msra.mxu0 0.0
    %838 = vmatprep.mubr.f32.mxu0 %v757
    %839 = vmatmul.mubr.f32.gmra.mrb[0].mxu0 %v743
    %v840 = vpop.f32.mrb[0].mxu0
    %v841 = vadd.f32 0.0, %v840
    %v842 = vpop.f32.mrb[0].mxu0
    %v843 = vadd.f32 0.0, %v842
    %844 = vmatprep.mubr.f32.mxu0 %v760
    %845 = vmatmul.mubr.f32.gmra.mrb[0].mxu0 %v745
    %v846 = vpop.f32.mrb[0].mxu0
    %v847 = vadd.f32 0.0, %v846
    %v848 = vpop.f32.mrb[0].mxu0
    %v849 = vadd.f32 0.0, %v848
    %850 = vmatprep.mubr.f32.mxu0 %v763
    %851 = vmatmul.mubr.f32.gmra.mrb[0].mxu0 %v747
    %v852 = vpop.f32.mrb[0].mxu0
    %v853 = vadd.f32 0.0, %v852
    %v854 = vpop.f32.mrb[0].mxu0
    %v855 = vadd.f32 0.0, %v854
    %856 = vmatprep.mubr.f32.mxu0 %v766
    %857 = vmatmul.mubr.f32.gmra.mrb[0].mxu0 %v749
    %v858 = vpop.f32.mrb[0].mxu0
    %v859 = vadd.f32 0.0, %v858
    %v860 = vpop.f32.mrb[0].mxu0
    %v861 = vadd.f32 0.0, %v860
    %862 = vmatprep.mubr.f32.mxu0 %v769
    %863 = vmatmul.mubr.f32.gmra.mrb[0].mxu0 %v751
    %v864 = vpop.f32.mrb[0].mxu0
    %v865 = vadd.f32 0.0, %v864
    %v866 = vpop.f32.mrb[0].mxu0
    %v867 = vadd.f32 0.0, %v866
    %868 = vmatprep.mubr.f32.mxu0 %v772
    %869 = vmatmul.mubr.f32.gmra.mrb[0].mxu0 %v753
    %v870 = vpop.f32.mrb[0].mxu0
    %v871 = vadd.f32 0.0, %v870
    %v872 = vpop.f32.mrb[0].mxu0
    %v873 = vadd.f32 0.0, %v872
    %874 = vdwg.mxu0
    %v875 = vadd.f32 %v841, %v843
    %876 = vadd.xlane.f32.xlu0 %v875
    %v877 = vpop.xlane.xlu0 %876
    %v878 = vadd.f32 %v847, %v849
    %879 = vadd.xlane.f32.xlu0 %v878
    %v880 = vpop.xlane.xlu0 %879
    %v881 = vadd.f32 %v853, %v855
    %882 = vadd.xlane.f32.xlu0 %v881
    %v883 = vpop.xlane.xlu0 %882
    %v884 = vadd.f32 %v859, %v861
    %885 = vadd.xlane.f32.xlu0 %v884
    %v886 = vpop.xlane.xlu0 %885
    %v887 = vadd.f32 %v865, %v867
    %888 = vadd.xlane.f32.xlu0 %v887
    %v889 = vpop.xlane.xlu0 %888
    %v890 = vadd.f32 %v871, %v873
    %891 = vadd.xlane.f32.xlu0 %v890
    %v892 = vpop.xlane.xlu0 %891
    %v893 = vmul.f32 %v877, 0.00390625
    %v894 = vmul.f32 %v880, 0.00390625
    %v895 = vmul.f32 %v883, 0.00390625
    %v896 = vmul.f32 %v886, 0.00390625
    %v897 = vmul.f32 %v889, 0.00390625
    %v898 = vmul.f32 %v892, 0.00390625
    %v899 = vmul.f32 %v841, %v841
    %v900 = vmul.f32 %v843, %v843
    %v901 = vmul.f32 %v847, %v847
    %v902 = vmul.f32 %v849, %v849
    %v903 = vmul.f32 %v853, %v853
    %v904 = vmul.f32 %v855, %v855
    %v905 = vmul.f32 %v859, %v859
    %v906 = vmul.f32 %v861, %v861
    %v907 = vmul.f32 %v865, %v865
    %v908 = vmul.f32 %v867, %v867
    %v909 = vmul.f32 %v871, %v871
    %v910 = vmul.f32 %v873, %v873
    %v911 = vadd.f32 %v899, %v900
    %912 = vadd.xlane.f32.xlu0 %v911
    %v913 = vpop.xlane.xlu0 %912
    %v914 = vadd.f32 %v901, %v902
    %915 = vadd.xlane.f32.xlu0 %v914
    %v916 = vpop.xlane.xlu0 %915
    %v917 = vadd.f32 %v903, %v904
    %918 = vadd.xlane.f32.xlu0 %v917
    %v919 = vpop.xlane.xlu0 %918
    %v920 = vadd.f32 %v905, %v906
    %921 = vadd.xlane.f32.xlu0 %v920
    %v922 = vpop.xlane.xlu0 %921
    %v923 = vadd.f32 %v907, %v908
    %924 = vadd.xlane.f32.xlu0 %v923
    %v925 = vpop.xlane.xlu0 %924
    %v926 = vadd.f32 %v909, %v910
    %927 = vadd.xlane.f32.xlu0 %v926
    %v928 = vpop.xlane.xlu0 %927
    %v929 = vmul.f32 %v913, 0.00390625
    %v930 = vmul.f32 %v916, 0.00390625
    %v931 = vmul.f32 %v919, 0.00390625
    %v932 = vmul.f32 %v922, 0.00390625
    %v933 = vmul.f32 %v925, 0.00390625
    %v934 = vmul.f32 %v928, 0.00390625
    %v935 = vmul.f32 %v893, %v893
    %v936 = vmul.f32 %v894, %v894
    %v937 = vmul.f32 %v895, %v895
    %v938 = vmul.f32 %v896, %v896
    %v939 = vmul.f32 %v897, %v897
    %v940 = vmul.f32 %v898, %v898
    %v941 = vsub.f32 %v929, %v935
    %v942 = vsub.f32 %v930, %v936
    %v943 = vsub.f32 %v931, %v937
    %v944 = vsub.f32 %v932, %v938
    %v945 = vsub.f32 %v933, %v939
    %v946 = vsub.f32 %v934, %v940
    %v947 = vld [vmem:[%s4] sm:$0xff]
    %v948 = vld [vmem:[%s4 + $0x8] sm:$0xff]
    %v949 = vld [vmem:[%s4 + $0x10] sm:$0xff]
    %v950 = vld [vmem:[%s4 + $0x18] sm:$0xff]
    %v951 = vld [vmem:[%s4 + $0x20] sm:$0xff]
    %v952 = vld [vmem:[%s4 + $0x28] sm:$0xff]
    %v953 = vadd.f32 %v941, 1e-05
    %v954 = vadd.f32 %v942, 1e-05
    %v955 = vadd.f32 %v943, 1e-05
    %v956 = vadd.f32 %v944, 1e-05
    %v957 = vadd.f32 %v945, 1e-05
    %v958 = vadd.f32 %v946, 1e-05
    %v959 = vrsqrt.pop %v953
    %v960 = vrsqrt.pop %v954
    %v961 = vrsqrt.pop %v955
    %v962 = vrsqrt.pop %v956
    %v963 = vrsqrt.pop %v957
    %v964 = vrsqrt.pop %v958
    %v965 = vmul.f32 %v947, %v959
    %v966 = vmul.f32 %v948, %v960
    %v967 = vmul.f32 %v949, %v961
    %v968 = vmul.f32 %v950, %v962
    %v969 = vmul.f32 %v951, %v963
    %v970 = vmul.f32 %v952, %v964
    %s971 = scalar_lea.vmem %s4, 48
    %v972 = vld [vmem:[%s971] sm:$0xff]
    %v973 = vld [vmem:[%s971 + $0x8] sm:$0xff]
    %v974 = vld [vmem:[%s971 + $0x10] sm:$0xff]
    %v975 = vld [vmem:[%s971 + $0x18] sm:$0xff]
    %v976 = vld [vmem:[%s971 + $0x20] sm:$0xff]
    %v977 = vld [vmem:[%s971 + $0x28] sm:$0xff]
    %v978 = vmul.f32 %v893, %v965
    %v979 = vmul.f32 %v894, %v966
    %v980 = vmul.f32 %v895, %v967
    %v981 = vmul.f32 %v896, %v968
    %v982 = vmul.f32 %v897, %v969
    %v983 = vmul.f32 %v898, %v970
    %v984 = vsub.f32 %v972, %v978
    %v985 = vsub.f32 %v973, %v979
    %v986 = vsub.f32 %v974, %v980
    %v987 = vsub.f32 %v975, %v981
    %v988 = vsub.f32 %v976, %v982
    %v989 = vsub.f32 %v977, %v983
    %991 = vset.pattern.permute.xlu0 0
    %992 = vperm.xlu0 %991, %v965
    %v993 = vpop.permute.xlu0 %992
    %996 = vset.pattern.permute.xlu0 0
    %997 = vperm.xlu0 %996, %v966
    %v998 = vpop.permute.xlu0 %997
    %1001 = vset.pattern.permute.xlu0 0
    %1002 = vperm.xlu0 %1001, %v967
    %v1003 = vpop.permute.xlu0 %1002
    %1006 = vset.pattern.permute.xlu0 0
    %1007 = vperm.xlu0 %1006, %v968
    %v1008 = vpop.permute.xlu0 %1007
    %1011 = vset.pattern.permute.xlu0 0
    %1012 = vperm.xlu0 %1011, %v969
    %v1013 = vpop.permute.xlu0 %1012
    %1016 = vset.pattern.permute.xlu0 0
    %1017 = vperm.xlu0 %1016, %v970
    %v1018 = vpop.permute.xlu0 %1017
    %v1020 = vmul.f32 %v841, %v993
    %v1021 = vmul.f32 %v843, %v993
    %v1022 = vmul.f32 %v847, %v998
    %v1023 = vmul.f32 %v849, %v998
    %v1024 = vmul.f32 %v853, %v1003
    %v1025 = vmul.f32 %v855, %v1003
    %v1026 = vmul.f32 %v859, %v1008
    %v1027 = vmul.f32 %v861, %v1008
    %v1028 = vmul.f32 %v865, %v1013
    %v1029 = vmul.f32 %v867, %v1013
    %v1030 = vmul.f32 %v871, %v1018
    %v1031 = vmul.f32 %v873, %v1018
    %1033 = vset.pattern.permute.xlu0 0
    %1034 = vperm.xlu0 %1033, %v984
    %v1035 = vpop.permute.xlu0 %1034
    %1038 = vset.pattern.permute.xlu0 0
    %1039 = vperm.xlu0 %1038, %v985
    %v1040 = vpop.permute.xlu0 %1039
    %1043 = vset.pattern.permute.xlu0 0
    %1044 = vperm.xlu0 %1043, %v986
    %v1045 = vpop.permute.xlu0 %1044
    %1048 = vset.pattern.permute.xlu0 0
    %1049 = vperm.xlu0 %1048, %v987
    %v1050 = vpop.permute.xlu0 %1049
    %1053 = vset.pattern.permute.xlu0 0
    %1054 = vperm.xlu0 %1053, %v988
    %v1055 = vpop.permute.xlu0 %1054
    %1058 = vset.pattern.permute.xlu0 0
    %1059 = vperm.xlu0 %1058, %v989
    %v1060 = vpop.permute.xlu0 %1059
    %v1062 = vadd.f32 %v1020, %v1035
    %v1063 = vadd.f32 %v1021, %v1035
    %v1064 = vadd.f32 %v1022, %v1040
    %v1065 = vadd.f32 %v1023, %v1040
    %v1066 = vadd.f32 %v1024, %v1045
    %v1067 = vadd.f32 %v1025, %v1045
    %v1068 = vadd.f32 %v1026, %v1050
    %v1069 = vadd.f32 %v1027, %v1050
    %v1070 = vadd.f32 %v1028, %v1055
    %v1071 = vadd.f32 %v1029, %v1055
    %v1072 = vadd.f32 %v1030, %v1060
    %v1073 = vadd.f32 %v1031, %v1060
    %v1074 = vmax.f32 %v1062, 0.0
    %v1075 = vmax.f32 %v1063, 0.0
    %v1076 = vmax.f32 %v1064, 0.0
    %v1077 = vmax.f32 %v1065, 0.0
    %v1078 = vmax.f32 %v1066, 0.0
    %v1079 = vmax.f32 %v1067, 0.0
    %v1080 = vmax.f32 %v1068, 0.0
    %v1081 = vmax.f32 %v1069, 0.0
    %v1082 = vmax.f32 %v1070, 0.0
    %v1083 = vmax.f32 %v1071, 0.0
    %v1084 = vmax.f32 %v1072, 0.0
    %v1085 = vmax.f32 %v1073, 0.0
    %1086 = vst [vmem:[#allocation2] sm:$0xff] %v1074
    %1087 = vst [vmem:[#allocation2 + $0x8] sm:$0xff] %v1076
    %1088 = vst [vmem:[#allocation2 + $0x10] sm:$0xff] %v1078
    %1089 = vst [vmem:[#allocation2 + $0x18] sm:$0xff] %v1080
    %1090 = vst [vmem:[#allocation2 + $0x20] sm:$0xff] %v1082
    %1091 = vst [vmem:[#allocation2 + $0x28] sm:$0xff] %v1084
    %s1092 = scalar_lea.vmem [#allocation2], 48
    %1093 = vst [vmem:[%s1092] sm:$0xff] %v1075
    %1094 = vst [vmem:[%s1092 + $0x8] sm:$0xff] %v1077
    %1095 = vst [vmem:[%s1092 + $0x10] sm:$0xff] %v1079
    %1096 = vst [vmem:[%s1092 + $0x18] sm:$0xff] %v1081
    %1097 = vst [vmem:[%s1092 + $0x20] sm:$0xff] %v1083
    %1098 = vst [vmem:[%s1092 + $0x28] sm:$0xff] %v1085
    // Predicated region
    $region22: #{resblock_forward.1} parent=1 // pred_check
      _
    $region23: #{resblock_forward.1} parent=1 // pred_check_branch
      %1100 = sbr.rel (0) target = $region25
    $region24: #{resblock_forward.1} parent=1 // pred_region
      %s1102 = ssub.s32 1536, 1536
      %1103 = vsyncadd [#allocation3], %s1102
      %s1104 = sshll.u32 [#allocation2], 4
      %s1105 = int_to_ptr.vmem [resolvable:$true] %s1104
      %1110 = dma.vmem_to_hbm [thread:$0]  %s1105, 1536, %s5, [#allocation3], 128, 128, 8
    $region25: #{resblock_forward.1} parent=1 // pred_fallthru
      _
    // Predicated region
    $region26: #{resblock_forward.1} parent=1 // pred_check
      _
    $region27: #{resblock_forward.1} parent=1 // pred_check_branch
      %1112 = sbr.rel (0) target = $region29
    $region28: #{resblock_forward.1} parent=1 // pred_region
      %1113 = dma.done [#allocation3], 1536
    $region29: #{resblock_forward.1} parent=1 // pred_fallthru
      _
    %1114 = vsyncpa [#allocation3], 1

</llo_original>
